<compile_context>
chip_gen: v7x
topology: tpu7x:2x2x1
jax: 0.10.0
libtpu: 0.0.40
codegen_flags: <defaults>
</compile_context>

<pallas_src>
import functools

import jax
import jax.numpy as jnp
from jax.experimental import pallas as pl
from jax.experimental.pallas import tpu as pltpu

_LANE = 128


def _round_up(n, m):
    return ((n + m - 1) // m) * m


def _policy_mlp_kernel(x_ref, w1_ref, b1_ref, w2_ref, b2_ref, w3_ref, b3_ref, o_ref):
    # Layer 1: Linear (bf16 operands, f32 accumulation) + bias + ReLU
    h = jnp.dot(x_ref[...], w1_ref[...], preferred_element_type=jnp.float32)
    h = jnp.maximum(h + b1_ref[...], 0.0)
    # (Dropout p=0.1 -> identity at inference)

    # Layer 2: Linear + bias + ReLU
    h = jnp.dot(h.astype(w2_ref.dtype), w2_ref[...], preferred_element_type=jnp.float32)
    h = jnp.maximum(h + b2_ref[...], 0.0)
    # (Dropout p=0.1 -> identity at inference)

    # Layer 3: Linear + bias (output columns zero-padded to a lane-dense 128 block)
    out = jnp.dot(h.astype(w3_ref.dtype), w3_ref[...], preferred_element_type=jnp.float32)
    o_ref[...] = (out + b3_ref[...]).astype(o_ref.dtype)


def prepare_params(params, *, compute_dtype=jnp.bfloat16):
    """One-time parameter packing, hoisted out of the per-forward path.

    Pads w3/b3 to 128 output lanes (unmasked, lane-dense vst in the kernel) and
    casts matmul operands to bf16 (biases stay f32). Returns (packed, action_dim).
    """
    w1, b1 = params["w1"], params["b1"]
    w2, b2 = params["w2"], params["b2"]
    w3, b3 = params["w3"], params["b3"]
    hidden_dim = w1.shape[1]
    action_dim = w3.shape[1]

    a_pad = _round_up(max(action_dim, _LANE), _LANE)
    w3_p = jnp.zeros((hidden_dim, a_pad), w3.dtype).at[:, :action_dim].set(w3)
    b3_p = jnp.zeros((1, a_pad), b3.dtype).at[:, :action_dim].set(b3.reshape(1, -1))

    packed = {
        "w1": w1.astype(compute_dtype),
        "b1": b1.reshape(1, -1).astype(jnp.float32),
        "w2": w2.astype(compute_dtype),
        "b2": b2.reshape(1, -1).astype(jnp.float32),
        "w3": w3_p.astype(compute_dtype),
        "b3": b3_p.astype(jnp.float32),
    }
    return packed, action_dim


def policy_net_forward(
    x,
    packed,
    action_dim,
    *,
    batch_tile=None,
    out_dtype=jnp.bfloat16,
    compute_dtype=jnp.bfloat16,
    core_parallel=False,   # set True on v7x (2 TensorCores) with grid length >= 2
    return_padded=False,   # True: skip the wrapper re-slice HBM pass; consumer slices
):
    """PolicyNet MLP forward as a fused Pallas kernel.

    x:      (batch, state_dim) float32
    packed: output of prepare_params(); weights (in_dim, out_dim), w3/b3 padded
            to 128 output lanes, matmul operands bf16, biases f32.

    batch_tile=None picks automatically:
      - batch <= 2048: a single grid step (best on 1-TC v5e/v6e).
      - larger batches: 1024-row tile (multiple of 256 -> full MXU height on
        v6e/v7x, grid >= 2 so core_parallel can split across v7x's 2 TCs).
    """
    w1, b1 = packed["w1"], packed["b1"]
    w2, b2 = packed["w2"], packed["b2"]
    w3, b3 = packed["w3"], packed["b3"]

    batch, state_dim = x.shape
    hidden_dim = w1.shape[1]
    a_pad = w3.shape[1]

    # --- adaptive tile / grid choice ---
    if batch_tile is None:
        if batch <= 2048:
            batch_tile = _round_up(max(batch, 8), 256)   # one grid step
        else:
            batch_tile = 1024                            # multiple of 256, grid >= 2
    batch_tile = _round_up(batch_tile, 8)

    b_padded = _round_up(batch, batch_tile)
    x_p = x if b_padded == batch else jnp.pad(x, ((0, b_padded - batch), (0, 0)))
    x_c = x_p.astype(compute_dtype)

    grid = (b_padded // batch_tile,)

    # Whole-parameter blocks with constant index_maps (resident across grid steps);
    # x / out tiled along the batch axis.
    in_specs = [
        pl.BlockSpec((batch_tile, state_dim), lambda i: (i, 0)),    # x
        pl.BlockSpec((state_dim, hidden_dim), lambda i: (0, 0)),    # w1
        pl.BlockSpec((1, hidden_dim), lambda i: (0, 0)),            # b1
        pl.BlockSpec((hidden_dim, hidden_dim), lambda i: (0, 0)),   # w2
        pl.BlockSpec((1, hidden_dim), lambda i: (0, 0)),            # b2
        pl.BlockSpec((hidden_dim, a_pad), lambda i: (0, 0)),        # w3 (padded)
        pl.BlockSpec((1, a_pad), lambda i: (0, 0)),                 # b3 (padded)
    ]
    out_specs = pl.BlockSpec((batch_tile, a_pad), lambda i: (i, 0))

    out_itemsize = jnp.dtype(out_dtype).itemsize
    in_itemsize = jnp.dtype(compute_dtype).itemsize

    # Cost estimate hint for XLA's scheduler.
    bytes_in = (x_c.size * in_itemsize
                + (w1.size + w2.size + w3.size) * in_itemsize
                + (b1.size + b2.size + b3.size) * 4)
    bytes_out = b_padded * a_pad * out_itemsize
    cost = pl.CostEstimate(
        flops=2 * b_padded * (state_dim * hidden_dim
                              + hidden_dim * hidden_dim
                              + hidden_dim * a_pad),
        transcendentals=0,
        bytes_accessed=int(bytes_in + bytes_out),
    )

    # Scoped-VMEM: only raise the limit if the (double-buffered) tiles need it.
    vmem_need = (2 * batch_tile * state_dim * in_itemsize          # x (double-buffered)
                 + 2 * batch_tile * a_pad * out_itemsize           # out (double-buffered)
                 + 2 * (w1.size + w2.size + w3.size) * in_itemsize # weights
                 + 2 * (b1.size + b2.size + b3.size) * 4)          # biases
    dims = (pltpu.CORE_PARALLEL,) if core_parallel else ("parallel",)
    compiler_kwargs = {"dimension_semantics": dims}
    if vmem_need > 14 * 1024 * 1024:
        compiler_kwargs["vmem_limit_bytes"] = int(min(vmem_need + (4 << 20), 60 << 20))

    out_padded = pl.pallas_call(
        _policy_mlp_kernel,
        out_shape=jax.ShapeDtypeStruct((b_padded, a_pad), out_dtype),
        grid_spec=pltpu.PrefetchScalarGridSpec(
            num_scalar_prefetch=0,
            grid=grid,
            in_specs=in_specs,
            out_specs=out_specs,
        ),
        compiler_params=pltpu.CompilerParams(**compiler_kwargs),
        cost_estimate=cost,
    )(x_c, w1, b1, w2, b2, w3, b3)

    if return_padded:
        # Consumer is expected to slice [:batch, :action_dim] (lets XLA fuse it).
        return out_padded
    return out_padded[:batch, :action_dim]


def init_policy_params(key, state_dim, action_dim, hidden_dim=128, dtype=jnp.float32):
    """Deterministic synthetic parameters (shapes match the nn.Linear layers)."""
    ks = jax.random.split(key, 6)

    def lin(kw, kb, fan_in, fan_out):
        bound = 1.0 / jnp.sqrt(jnp.float32(fan_in))
        w = jax.random.uniform(kw, (fan_in, fan_out), dtype, -bound, bound)
        b = jax.random.uniform(kb, (1, fan_out), dtype, -bound, bound)
        return w, b

    w1, b1 = lin(ks[0], ks[1], state_dim, hidden_dim)
    w2, b2 = lin(ks[2], ks[3], hidden_dim, hidden_dim)
    w3, b3 = lin(ks[4], ks[5], hidden_dim, action_dim)
    return {"w1": w1, "b1": b1, "w2": w2, "b2": b2, "w3": w3, "b3": b3}


def _reference_forward_f32(x, p):
    h = jnp.maximum(x @ p["w1"] + p["b1"], 0.0)
    h = jnp.maximum(h @ p["w2"] + p["b2"], 0.0)
    return h @ p["w3"] + p["b3"]


def _reference_forward_bf16(x, p):
    """Same precision recipe as the kernel: bf16 operands, f32 accumulation."""
    c = jnp.bfloat16
    dot = functools.partial(jnp.dot, preferred_element_type=jnp.float32)
    h = jnp.maximum(dot(x.astype(c), p["w1"].astype(c)) + p["b1"], 0.0)
    h = jnp.maximum(dot(h.astype(c), p["w2"].astype(c)) + p["b2"], 0.0)
    return dot(h.astype(c), p["w3"].astype(c)) + p["b3"]


if __name__ == "__main__":
    key = jax.random.PRNGKey(0)
    kx, kp = jax.random.split(key)

    # Small shapes consistent with the module: state_dim=16, hidden=128, action=4.
    batch, state_dim, hidden_dim, action_dim = 256, 16, 128, 4
    x = jax.random.normal(kx, (batch, state_dim), jnp.float32)
    params = init_policy_params(kp, state_dim, action_dim, hidden_dim)

    # One-time parameter packing (pad + cast), then the fused forward.
    packed, act_dim = prepare_params(params)
    out = policy_net_forward(x, packed, act_dim)   # batch=256 -> single grid step
    out = jax.block_until_ready(out)
    assert out.shape == (batch, action_dim)
    assert out.dtype == jnp.bfloat16

    out_f32 = out.astype(jnp.float32)

    # Check against a reference with the same bf16-operand / f32-accum recipe
    # (tolerance loosened vs f32-output version: bf16 output rounding ~0.4% rel).
    ref_bf16 = _reference_forward_bf16(x, params)
    assert jnp.allclose(out_f32, ref_bf16, atol=3e-2, rtol=2e-2), "mismatch vs bf16 reference"

    # Loose sanity check against the full-f32 PyTorch-equivalent math.
    ref_f32 = _reference_forward_f32(x, params)
    assert jnp.allclose(out_f32, ref_f32, atol=1e-1, rtol=5e-2), "mismatch vs f32 reference"

    print("KERNEL_OK")
</pallas_src>

<mosaic_0001>
module attributes {stable_mosaic.version = 11 : i64} {
  func.func @_policy_mlp_kernel(%arg0: i32, %arg1: memref<256x16xbf16, #tpu.memory_space<vmem>>, %arg2: memref<16x128xbf16, #tpu.memory_space<vmem>>, %arg3: memref<1x128xf32, #tpu.memory_space<vmem>>, %arg4: memref<128x128xbf16, #tpu.memory_space<vmem>>, %arg5: memref<1x128xf32, #tpu.memory_space<vmem>>, %arg6: memref<128x128xbf16, #tpu.memory_space<vmem>>, %arg7: memref<1x128xf32, #tpu.memory_space<vmem>>, %arg8: memref<256x128xbf16, #tpu.memory_space<vmem>>) attributes {dimension_semantics = [#tpu.dimension_semantics<parallel>], iteration_bounds = array<i64: 1>, scalar_prefetch = 0 : i64, scratch_operands = 0 : i64, tpu.core_type = #tpu.core_type<tc>, window_params = [{transform_indices = @transform_0, window_bounds = array<i64: 256, 16>}, {pipeline_mode = #tpu.pipeline_mode<synchronous>, transform_indices = @transform_1, window_bounds = array<i64: 16, 128>}, {pipeline_mode = #tpu.pipeline_mode<synchronous>, transform_indices = @transform_2, window_bounds = array<i64: 1, 128>}, {pipeline_mode = #tpu.pipeline_mode<synchronous>, transform_indices = @transform_3, window_bounds = array<i64: 128, 128>}, {pipeline_mode = #tpu.pipeline_mode<synchronous>, transform_indices = @transform_4, window_bounds = array<i64: 1, 128>}, {pipeline_mode = #tpu.pipeline_mode<synchronous>, transform_indices = @transform_5, window_bounds = array<i64: 128, 128>}, {pipeline_mode = #tpu.pipeline_mode<synchronous>, transform_indices = @transform_6, window_bounds = array<i64: 1, 128>}, {transform_indices = @transform_7, window_bounds = array<i64: 256, 128>}]} {
    %c0 = arith.constant 0 : index
    %c0_0 = arith.constant 0 : index
    %0 = vector.load %arg1[%c0, %c0_0] : memref<256x16xbf16, #tpu.memory_space<vmem>>, vector<256x16xbf16>
    %c0_1 = arith.constant 0 : index
    %c0_2 = arith.constant 0 : index
    %1 = vector.load %arg2[%c0_1, %c0_2] : memref<16x128xbf16, #tpu.memory_space<vmem>>, vector<16x128xbf16>
    %cst = arith.constant dense<0.000000e+00> : vector<256x128xf32>
    %2 = tpu.matmul %0, %1, %cst {dimension_numbers = #tpu.dot_dimension_numbers<[1], [0], [0], [1], [0, 0, 1, 1], [], []>} : vector<256x16xbf16>, vector<16x128xbf16>, vector<256x128xf32> -> vector<256x128xf32>
    %c0_3 = arith.constant 0 : index
    %c0_4 = arith.constant 0 : index
    %3 = vector.load %arg3[%c0_3, %c0_4] : memref<1x128xf32, #tpu.memory_space<vmem>>, vector<1x128xf32>
    %4 = vector.broadcast %3 : vector<1x128xf32> to vector<256x128xf32>
    %5 = arith.addf %2, %4 : vector<256x128xf32>
    %cst_5 = arith.constant 0.000000e+00 : f32
    %6 = vector.broadcast %cst_5 : f32 to vector<256x128xf32>
    %7 = arith.maximumf %5, %6 : vector<256x128xf32>
    %8 = arith.truncf %7 : vector<256x128xf32> to vector<256x128xbf16>
    %c0_6 = arith.constant 0 : index
    %c0_7 = arith.constant 0 : index
    %9 = vector.load %arg4[%c0_6, %c0_7] : memref<128x128xbf16, #tpu.memory_space<vmem>>, vector<128x128xbf16>
    %cst_8 = arith.constant dense<0.000000e+00> : vector<256x128xf32>
    %10 = tpu.matmul %8, %9, %cst_8 {dimension_numbers = #tpu.dot_dimension_numbers<[1], [0], [0], [1], [0, 0, 1, 1], [], []>} : vector<256x128xbf16>, vector<128x128xbf16>, vector<256x128xf32> -> vector<256x128xf32>
    %c0_9 = arith.constant 0 : index
    %c0_10 = arith.constant 0 : index
    %11 = vector.load %arg5[%c0_9, %c0_10] : memref<1x128xf32, #tpu.memory_space<vmem>>, vector<1x128xf32>
    %12 = vector.broadcast %11 : vector<1x128xf32> to vector<256x128xf32>
    %13 = arith.addf %10, %12 : vector<256x128xf32>
    %cst_11 = arith.constant 0.000000e+00 : f32
    %14 = vector.broadcast %cst_11 : f32 to vector<256x128xf32>
    %15 = arith.maximumf %13, %14 : vector<256x128xf32>
    %16 = arith.truncf %15 : vector<256x128xf32> to vector<256x128xbf16>
    %c0_12 = arith.constant 0 : index
    %c0_13 = arith.constant 0 : index
    %17 = vector.load %arg6[%c0_12, %c0_13] : memref<128x128xbf16, #tpu.memory_space<vmem>>, vector<128x128xbf16>
    %cst_14 = arith.constant dense<0.000000e+00> : vector<256x128xf32>
    %18 = tpu.matmul %16, %17, %cst_14 {dimension_numbers = #tpu.dot_dimension_numbers<[1], [0], [0], [1], [0, 0, 1, 1], [], []>} : vector<256x128xbf16>, vector<128x128xbf16>, vector<256x128xf32> -> vector<256x128xf32>
    %c0_15 = arith.constant 0 : index
    %c0_16 = arith.constant 0 : index
    %19 = vector.load %arg7[%c0_15, %c0_16] : memref<1x128xf32, #tpu.memory_space<vmem>>, vector<1x128xf32>
    %20 = vector.broadcast %19 : vector<1x128xf32> to vector<256x128xf32>
    %21 = arith.addf %18, %20 : vector<256x128xf32>
    %22 = arith.truncf %21 : vector<256x128xf32> to vector<256x128xbf16>
    %c0_17 = arith.constant 0 : index
    %c0_18 = arith.constant 0 : index
    %23 = vector.load %arg8[%c0_17, %c0_18] : memref<256x128xbf16, #tpu.memory_space<vmem>>, vector<256x128xbf16>
    tpu.vector_store %arg8[%c0_17, %c0_18], %22 {strides = array<i32>} : memref<256x128xbf16, #tpu.memory_space<vmem>>, vector<256x128xbf16>,
    return
  }
  func.func @transform_0(%arg0: i32) -> (i32, i32) {
    %c0_i32 = arith.constant 0 : i32
    %c0_i32_0 = arith.constant 0 : i32
    return %arg0, %c0_i32 : i32, i32
  }
  func.func @transform_1(%arg0: i32) -> (i32, i32) {
    %c0_i32 = arith.constant 0 : i32
    %c0_i32_0 = arith.constant 0 : i32
    %c0_i32_1 = arith.constant 0 : i32
    return %c0_i32, %c0_i32_0 : i32, i32
  }
  func.func @transform_2(%arg0: i32) -> (i32, i32) {
    %c0_i32 = arith.constant 0 : i32
    %c0_i32_0 = arith.constant 0 : i32
    %c0_i32_1 = arith.constant 0 : i32
    return %c0_i32, %c0_i32_0 : i32, i32
  }
  func.func @transform_3(%arg0: i32) -> (i32, i32) {
    %c0_i32 = arith.constant 0 : i32
    %c0_i32_0 = arith.constant 0 : i32
    %c0_i32_1 = arith.constant 0 : i32
    return %c0_i32, %c0_i32_0 : i32, i32
  }
  func.func @transform_4(%arg0: i32) -> (i32, i32) {
    %c0_i32 = arith.constant 0 : i32
    %c0_i32_0 = arith.constant 0 : i32
    %c0_i32_1 = arith.constant 0 : i32
    return %c0_i32, %c0_i32_0 : i32, i32
  }
  func.func @transform_5(%arg0: i32) -> (i32, i32) {
    %c0_i32 = arith.constant 0 : i32
    %c0_i32_0 = arith.constant 0 : i32
    %c0_i32_1 = arith.constant 0 : i32
    return %c0_i32, %c0_i32_0 : i32, i32
  }
  func.func @transform_6(%arg0: i32) -> (i32, i32) {
    %c0_i32 = arith.constant 0 : i32
    %c0_i32_0 = arith.constant 0 : i32
    %c0_i32_1 = arith.constant 0 : i32
    return %c0_i32, %c0_i32_0 : i32, i32
  }
  func.func @transform_7(%arg0: i32) -> (i32, i32) {
    %c0_i32 = arith.constant 0 : i32
    %c0_i32_0 = arith.constant 0 : i32
    return %arg0, %c0_i32 : i32, i32
  }
}

</mosaic_0001>

<llo_original>
// kernel: tpu_custom_call.1
$region0: #{tpu_custom_call.1}
  #allocation0 [shape = 'u32[]', space=smem, size = 0x4, offset = 0x4, fixed_abs, tag = 'smem constant byte address 0x4 - core index']
  #allocation1 [shape = 'u32[144,128]{1,0:T(1,128)}', space=vmem, size = 0x12000, scoped, tag = 'internal scratch']
  %s0 = inlined_call_operand.vmem [shape: bf16[256,16], index: 0, kind: input, shape index: {}]
  %s1 = inlined_call_operand.vmem [shape: bf16[16,128], index: 1, kind: input, shape index: {}]
  %s2 = inlined_call_operand.vmem [shape: f32[1,128], index: 2, kind: input, shape index: {}]
  %s3 = inlined_call_operand.vmem [shape: bf16[128,128], index: 3, kind: input, shape index: {}]
  %s4 = inlined_call_operand.vmem [shape: f32[1,128], index: 4, kind: input, shape index: {}]
  %s5 = inlined_call_operand.vmem [shape: bf16[128,128], index: 5, kind: input, shape index: {}]
  %s6 = inlined_call_operand.vmem [shape: f32[1,128], index: 6, kind: input, shape index: {}]
  %s7 = inlined_call_operand.hbm [shape: bf16[256,128], index: 7, kind: output, shape index: {}]
  %s8 = sld [smem:[#allocation0]]
  $region38: #{tpu_custom_call.1} parent=0
    _
  %s10 = ssub.s32 1, %s8
  %s11 = scalar_select 0, %s10, %s8
  $region1: #{tpu_custom_call.1} parent=0
    #allocation2 [shape = 'u8[65536]{0}', space=vmem, size = 0x10000, scoped, tag = 'output window, operand 0, single buffered']
    #allocation3 [shape = 's32[1]{0}', space=sflag, size = 0x4, scoped, tag = 'scoped memory for tpu_custom_call.1']
    %12 = vsyncpa [#allocation3], 0
    // Predicated region
    $region2: #{tpu_custom_call.1} parent=1 // pred_check
      _
    $region3: #{tpu_custom_call.1} parent=1 // pred_check_branch
      %14 = sbr.rel (0) target = $region5
    $region4: #{tpu_custom_call.1} parent=1 // pred_region
      _
    $region5: #{tpu_custom_call.1} parent=1 // pred_fallthru
      _
    // Predicated region
    $region6: #{tpu_custom_call.1} parent=1 // pred_check
      _
    $region7: #{tpu_custom_call.1} parent=1 // pred_check_branch
      %16 = sbr.rel (0) target = $region9
    $region8: #{tpu_custom_call.1} parent=1 // pred_region
      _
    $region9: #{tpu_custom_call.1} parent=1 // pred_fallthru
      _
    // Predicated region
    $region10: #{tpu_custom_call.1} parent=1 // pred_check
      _
    $region11: #{tpu_custom_call.1} parent=1 // pred_check_branch
      %18 = sbr.rel (0) target = $region13
    $region12: #{tpu_custom_call.1} parent=1 // pred_region
      _
    $region13: #{tpu_custom_call.1} parent=1 // pred_fallthru
      _
    // Predicated region
    $region14: #{tpu_custom_call.1} parent=1 // pred_check
      _
    $region15: #{tpu_custom_call.1} parent=1 // pred_check_branch
      %20 = sbr.rel (0) target = $region17
    $region16: #{tpu_custom_call.1} parent=1 // pred_region
      _
    $region17: #{tpu_custom_call.1} parent=1 // pred_fallthru
      _
    // Predicated region
    $region18: #{tpu_custom_call.1} parent=1 // pred_check
      _
    $region19: #{tpu_custom_call.1} parent=1 // pred_check_branch
      %22 = sbr.rel (0) target = $region21
    $region20: #{tpu_custom_call.1} parent=1 // pred_region
      _
    $region21: #{tpu_custom_call.1} parent=1 // pred_fallthru
      _
    // Predicated region
    $region22: #{tpu_custom_call.1} parent=1 // pred_check
      _
    $region23: #{tpu_custom_call.1} parent=1 // pred_check_branch
      %24 = sbr.rel (0) target = $region25
    $region24: #{tpu_custom_call.1} parent=1 // pred_region
      _
    $region25: #{tpu_custom_call.1} parent=1 // pred_fallthru
      _
    // Predicated region
    $region26: #{tpu_custom_call.1} parent=1 // pred_check
      _
    $region27: #{tpu_custom_call.1} parent=1 // pred_check_branch
      %26 = sbr.rel (0) target = $region29
    $region28: #{tpu_custom_call.1} parent=1 // pred_region
      _
    $region29: #{tpu_custom_call.1} parent=1 // pred_fallthru
      _
    %v28 = vld [vmem:[%s0] sm:$0xf]
    %v29 = vld [vmem:[%s0 + $0x4] sm:$0xf]
    %v30 = vld [vmem:[%s0 + $0x8] sm:$0xf]
    %v31 = vld [vmem:[%s0 + $0xc] sm:$0xf]
    %v32 = vld [vmem:[%s0 + $0x10] sm:$0xf]
    %v33 = vld [vmem:[%s0 + $0x14] sm:$0xf]
    %v34 = vld [vmem:[%s0 + $0x18] sm:$0xf]
    %v35 = vld [vmem:[%s0 + $0x1c] sm:$0xf]
    %v36 = vld [vmem:[%s0 + $0x20] sm:$0xf]
    %v37 = vld [vmem:[%s0 + $0x24] sm:$0xf]
    %v38 = vld [vmem:[%s0 + $0x28] sm:$0xf]
    %v39 = vld [vmem:[%s0 + $0x2c] sm:$0xf]
    %v40 = vld [vmem:[%s0 + $0x30] sm:$0xf]
    %v41 = vld [vmem:[%s0 + $0x34] sm:$0xf]
    %v42 = vld [vmem:[%s0 + $0x38] sm:$0xf]
    %v43 = vld [vmem:[%s0 + $0x3c] sm:$0xf]
    %v44 = vld [vmem:[%s0 + $0x40] sm:$0xf]
    %v45 = vld [vmem:[%s0 + $0x44] sm:$0xf]
    %v46 = vld [vmem:[%s0 + $0x48] sm:$0xf]
    %v47 = vld [vmem:[%s0 + $0x4c] sm:$0xf]
    %v48 = vld [vmem:[%s0 + $0x50] sm:$0xf]
    %v49 = vld [vmem:[%s0 + $0x54] sm:$0xf]
    %v50 = vld [vmem:[%s0 + $0x58] sm:$0xf]
    %v51 = vld [vmem:[%s0 + $0x5c] sm:$0xf]
    %v52 = vld [vmem:[%s0 + $0x60] sm:$0xf]
    %v53 = vld [vmem:[%s0 + $0x64] sm:$0xf]
    %v54 = vld [vmem:[%s0 + $0x68] sm:$0xf]
    %v55 = vld [vmem:[%s0 + $0x6c] sm:$0xf]
    %v56 = vld [vmem:[%s0 + $0x70] sm:$0xf]
    %v57 = vld [vmem:[%s0 + $0x74] sm:$0xf]
    %v58 = vld [vmem:[%s0 + $0x78] sm:$0xf]
    %v59 = vld [vmem:[%s0 + $0x7c] sm:$0xf]
    %v60 = vld [vmem:[%s1] sm:$0xf]
    %v61 = vld [vmem:[%s1 + $0x4] sm:$0xf]
    %v62 = vld [vmem:[%s2] sm:$0x1]
    %v64 = vlaneseq
    %v65 = vshrl.u32 %v64, 7
    %v66 = vsub.s32 0, %v65
    %v67 = vrot.slane %v62, %v66
    %v101 = vunpack.c.l.b16 %v28
    %v102 = vunpack.c.l.b16 %v29
    %v103 = vunpack.c.l.b16 %v30
    %v104 = vunpack.c.l.b16 %v31
    %v105 = vunpack.c.l.b16 %v32
    %v106 = vunpack.c.l.b16 %v33
    %v107 = vunpack.c.l.b16 %v34
    %v108 = vunpack.c.l.b16 %v35
    %v109 = vunpack.c.l.b16 %v36
    %v110 = vunpack.c.l.b16 %v37
    %v111 = vunpack.c.l.b16 %v38
    %v112 = vunpack.c.l.b16 %v39
    %v113 = vunpack.c.l.b16 %v40
    %v114 = vunpack.c.l.b16 %v41
    %v115 = vunpack.c.l.b16 %v42
    %v116 = vunpack.c.l.b16 %v43
    %v117 = vunpack.c.l.b16 %v44
    %v118 = vunpack.c.l.b16 %v45
    %v119 = vunpack.c.l.b16 %v46
    %v120 = vunpack.c.l.b16 %v47
    %v121 = vunpack.c.l.b16 %v48
    %v122 = vunpack.c.l.b16 %v49
    %v123 = vunpack.c.l.b16 %v50
    %v124 = vunpack.c.l.b16 %v51
    %v125 = vunpack.c.l.b16 %v52
    %v126 = vunpack.c.l.b16 %v53
    %v127 = vunpack.c.l.b16 %v54
    %v128 = vunpack.c.l.b16 %v55
    %v129 = vunpack.c.l.b16 %v56
    %v130 = vunpack.c.l.b16 %v57
    %v131 = vunpack.c.l.b16 %v58
    %v132 = vunpack.c.l.b16 %v59
    %v133 = vpack.c.b16 %v102, %v101
    %v134 = vpack.c.b16 %v104, %v103
    %v135 = vpack.c.b16 %v106, %v105
    %v136 = vpack.c.b16 %v108, %v107
    %v137 = vpack.c.b16 %v110, %v109
    %v138 = vpack.c.b16 %v112, %v111
    %v139 = vpack.c.b16 %v114, %v113
    %v140 = vpack.c.b16 %v116, %v115
    %v141 = vpack.c.b16 %v118, %v117
    %v142 = vpack.c.b16 %v120, %v119
    %v143 = vpack.c.b16 %v122, %v121
    %v144 = vpack.c.b16 %v124, %v123
    %v145 = vpack.c.b16 %v126, %v125
    %v146 = vpack.c.b16 %v128, %v127
    %v147 = vpack.c.b16 %v130, %v129
    %v148 = vpack.c.b16 %v132, %v131
    %v151 = vunpack.c.l.b16 %v60
    %v152 = vunpack.c.l.b16 %v61
    %v153 = vpack.c.b16 %v152, %v151
    %vm155 = vcmask 130048
    %v157 = vsel %vm155, %v133, 0
    %v160 = vsel %vm155, %v134, 0
    %v163 = vsel %vm155, %v135, 0
    %v166 = vsel %vm155, %v136, 0
    %v169 = vsel %vm155, %v137, 0
    %v172 = vsel %vm155, %v138, 0
    %v175 = vsel %vm155, %v139, 0
    %v178 = vsel %vm155, %v140, 0
    %v181 = vsel %vm155, %v141, 0
    %v184 = vsel %vm155, %v142, 0
    %v187 = vsel %vm155, %v143, 0
    %v190 = vsel %vm155, %v144, 0
    %v193 = vsel %vm155, %v145, 0
    %v196 = vsel %vm155, %v146, 0
    %v199 = vsel %vm155, %v147, 0
    %v202 = vsel %vm155, %v148, 0
    %204 = vmatprep.subr.bf16.mxu0 0
    %205 = vmatpush1.bf16.msra.mxu0 %v153
    %206 = vmatprep.subr.bf16.mxu0 0
    %207 = vmatpush1.bf16.msra.mxu0 0
    %208 = vmatprep.subr.bf16.mxu0 0
    %209 = vmatpush1.bf16.msra.mxu0 0
    %210 = vmatprep.subr.bf16.mxu0 0
    %211 = vmatpush1.bf16.msra.mxu0 0
    %212 = vmatprep.subr.bf16.mxu0 0
    %213 = vmatpush1.bf16.msra.mxu0 0
    %214 = vmatprep.subr.bf16.mxu0 0
    %215 = vmatpush1.bf16.msra.mxu0 0
    %216 = vmatprep.subr.bf16.mxu0 0
    %217 = vmatpush1.bf16.msra.mxu0 0
    %218 = vmatprep.subr.bf16.mxu0 0
    %219 = vmatpush1.bf16.msra.mxu0 0
    %220 = vmatprep.subr.bf16.mxu0 0
    %221 = vmatpush1.bf16.msra.mxu0 0
    %222 = vmatprep.subr.bf16.mxu0 0
    %223 = vmatpush1.bf16.msra.mxu0 0
    %224 = vmatprep.subr.bf16.mxu0 0
    %225 = vmatpush1.bf16.msra.mxu0 0
    %226 = vmatprep.subr.bf16.mxu0 0
    %227 = vmatpush1.bf16.msra.mxu0 0
    %228 = vmatprep.subr.bf16.mxu0 0
    %229 = vmatpush1.bf16.msra.mxu0 0
    %230 = vmatprep.subr.bf16.mxu0 0
    %231 = vmatpush1.bf16.msra.mxu0 0
    %232 = vmatprep.subr.bf16.mxu0 0
    %233 = vmatpush1.bf16.msra.mxu0 0
    %234 = vmatprep.subr.bf16.mxu0 0
    %235 = vmatpush1.bf16.msra.mxu0 0
    %236 = vmatprep.mubr.bf16.mxu0 0
    %237 = vmatmul.mubr.bf16.gmra.mrb[0].mxu0 %v157
    %v238 = vpop.f32.mrb[0].mxu0
    %v239 = vadd.f32 %v67, %v238
    %v240 = vpop.f32.mrb[0].mxu0
    %v241 = vpop.f32.mrb[0].mxu0
    %v242 = vadd.f32 %v67, %v241
    %v243 = vpop.f32.mrb[0].mxu0
    %244 = vmatprep.mubr.bf16.mxu0 0
    %245 = vmatmul.mubr.bf16.gmra.mrb[0].mxu0 %v160
    %v246 = vpop.f32.mrb[0].mxu0
    %v247 = vadd.f32 %v67, %v246
    %v248 = vpop.f32.mrb[0].mxu0
    %v249 = vpop.f32.mrb[0].mxu0
    %v250 = vadd.f32 %v67, %v249
    %v251 = vpop.f32.mrb[0].mxu0
    %252 = vmatprep.mubr.bf16.mxu0 0
    %253 = vmatmul.mubr.bf16.gmra.mrb[0].mxu0 %v163
    %v254 = vpop.f32.mrb[0].mxu0
    %v255 = vadd.f32 %v67, %v254
    %v256 = vpop.f32.mrb[0].mxu0
    %v257 = vpop.f32.mrb[0].mxu0
    %v258 = vadd.f32 %v67, %v257
    %v259 = vpop.f32.mrb[0].mxu0
    %260 = vmatprep.mubr.bf16.mxu0 0
    %261 = vmatmul.mubr.bf16.gmra.mrb[0].mxu0 %v166
    %v262 = vpop.f32.mrb[0].mxu0
    %v263 = vadd.f32 %v67, %v262
    %v264 = vpop.f32.mrb[0].mxu0
    %v265 = vpop.f32.mrb[0].mxu0
    %v266 = vadd.f32 %v67, %v265
    %v267 = vpop.f32.mrb[0].mxu0
    %268 = vmatprep.mubr.bf16.mxu0 0
    %269 = vmatmul.mubr.bf16.gmra.mrb[0].mxu0 %v169
    %v270 = vpop.f32.mrb[0].mxu0
    %v271 = vadd.f32 %v67, %v270
    %v272 = vpop.f32.mrb[0].mxu0
    %v273 = vpop.f32.mrb[0].mxu0
    %v274 = vadd.f32 %v67, %v273
    %v275 = vpop.f32.mrb[0].mxu0
    %276 = vmatprep.mubr.bf16.mxu0 0
    %277 = vmatmul.mubr.bf16.gmra.mrb[0].mxu0 %v172
    %v278 = vpop.f32.mrb[0].mxu0
    %v279 = vadd.f32 %v67, %v278
    %v280 = vpop.f32.mrb[0].mxu0
    %v281 = vpop.f32.mrb[0].mxu0
    %v282 = vadd.f32 %v67, %v281
    %v283 = vpop.f32.mrb[0].mxu0
    %284 = vmatprep.mubr.bf16.mxu0 0
    %285 = vmatmul.mubr.bf16.gmra.mrb[0].mxu0 %v175
    %v286 = vpop.f32.mrb[0].mxu0
    %v287 = vadd.f32 %v67, %v286
    %v288 = vpop.f32.mrb[0].mxu0
    %v289 = vpop.f32.mrb[0].mxu0
    %v290 = vadd.f32 %v67, %v289
    %v291 = vpop.f32.mrb[0].mxu0
    %292 = vmatprep.mubr.bf16.mxu0 0
    %293 = vmatmul.mubr.bf16.gmra.mrb[0].mxu0 %v178
    %v294 = vpop.f32.mrb[0].mxu0
    %v295 = vadd.f32 %v67, %v294
    %v296 = vpop.f32.mrb[0].mxu0
    %v297 = vpop.f32.mrb[0].mxu0
    %v298 = vadd.f32 %v67, %v297
    %v299 = vpop.f32.mrb[0].mxu0
    %300 = vmatprep.mubr.bf16.mxu0 0
    %301 = vmatmul.mubr.bf16.gmra.mrb[0].mxu0 %v181
    %v302 = vpop.f32.mrb[0].mxu0
    %v303 = vadd.f32 %v67, %v302
    %v304 = vpop.f32.mrb[0].mxu0
    %v305 = vpop.f32.mrb[0].mxu0
    %v306 = vadd.f32 %v67, %v305
    %v307 = vpop.f32.mrb[0].mxu0
    %308 = vmatprep.mubr.bf16.mxu0 0
    %309 = vmatmul.mubr.bf16.gmra.mrb[0].mxu0 %v184
    %v310 = vpop.f32.mrb[0].mxu0
    %v311 = vadd.f32 %v67, %v310
    %v312 = vpop.f32.mrb[0].mxu0
    %v313 = vpop.f32.mrb[0].mxu0
    %v314 = vadd.f32 %v67, %v313
    %v315 = vpop.f32.mrb[0].mxu0
    %316 = vmatprep.mubr.bf16.mxu0 0
    %317 = vmatmul.mubr.bf16.gmra.mrb[0].mxu0 %v187
    %v318 = vpop.f32.mrb[0].mxu0
    %v319 = vadd.f32 %v67, %v318
    %v320 = vpop.f32.mrb[0].mxu0
    %v321 = vpop.f32.mrb[0].mxu0
    %v322 = vadd.f32 %v67, %v321
    %v323 = vpop.f32.mrb[0].mxu0
    %324 = vmatprep.mubr.bf16.mxu0 0
    %325 = vmatmul.mubr.bf16.gmra.mrb[0].mxu0 %v190
    %v326 = vpop.f32.mrb[0].mxu0
    %v327 = vadd.f32 %v67, %v326
    %v328 = vpop.f32.mrb[0].mxu0
    %v329 = vpop.f32.mrb[0].mxu0
    %v330 = vadd.f32 %v67, %v329
    %v331 = vpop.f32.mrb[0].mxu0
    %332 = vmatprep.mubr.bf16.mxu0 0
    %333 = vmatmul.mubr.bf16.gmra.mrb[0].mxu0 %v193
    %v334 = vpop.f32.mrb[0].mxu0
    %v335 = vadd.f32 %v67, %v334
    %v336 = vpop.f32.mrb[0].mxu0
    %v337 = vpop.f32.mrb[0].mxu0
    %v338 = vadd.f32 %v67, %v337
    %v339 = vpop.f32.mrb[0].mxu0
    %340 = vmatprep.mubr.bf16.mxu0 0
    %341 = vmatmul.mubr.bf16.gmra.mrb[0].mxu0 %v196
    %v342 = vpop.f32.mrb[0].mxu0
    %v343 = vadd.f32 %v67, %v342
    %v344 = vpop.f32.mrb[0].mxu0
    %v345 = vpop.f32.mrb[0].mxu0
    %v346 = vadd.f32 %v67, %v345
    %v347 = vpop.f32.mrb[0].mxu0
    %348 = vmatprep.mubr.bf16.mxu0 0
    %349 = vmatmul.mubr.bf16.gmra.mrb[0].mxu0 %v199
    %v350 = vpop.f32.mrb[0].mxu0
    %v351 = vadd.f32 %v67, %v350
    %v352 = vpop.f32.mrb[0].mxu0
    %v353 = vpop.f32.mrb[0].mxu0
    %v354 = vadd.f32 %v67, %v353
    %v355 = vpop.f32.mrb[0].mxu0
    %356 = vmatprep.mubr.bf16.mxu0 0
    %357 = vmatmul.mubr.bf16.gmra.mrb[0].mxu0 %v202
    %v358 = vpop.f32.mrb[0].mxu0
    %v359 = vadd.f32 %v67, %v358
    %v360 = vpop.f32.mrb[0].mxu0
    %v361 = vpop.f32.mrb[0].mxu0
    %v362 = vadd.f32 %v67, %v361
    %v363 = vpop.f32.mrb[0].mxu0
    %364 = vdwg.mxu0
    %v365 = vmax.f32 %v239, 0.0
    %v366 = vmax.f32 %v242, 0.0
    %v367 = vmax.f32 %v247, 0.0
    %v368 = vmax.f32 %v250, 0.0
    %v369 = vmax.f32 %v255, 0.0
    %v370 = vmax.f32 %v258, 0.0
    %v371 = vmax.f32 %v263, 0.0
    %v372 = vmax.f32 %v266, 0.0
    %v373 = vmax.f32 %v271, 0.0
    %v374 = vmax.f32 %v274, 0.0
    %v375 = vmax.f32 %v279, 0.0
    %v376 = vmax.f32 %v282, 0.0
    %v377 = vmax.f32 %v287, 0.0
    %v378 = vmax.f32 %v290, 0.0
    %v379 = vmax.f32 %v295, 0.0
    %v380 = vmax.f32 %v298, 0.0
    %v381 = vmax.f32 %v303, 0.0
    %v382 = vmax.f32 %v306, 0.0
    %v383 = vmax.f32 %v311, 0.0
    %v384 = vmax.f32 %v314, 0.0
    %v385 = vmax.f32 %v319, 0.0
    %v386 = vmax.f32 %v322, 0.0
    %v387 = vmax.f32 %v327, 0.0
    %v388 = vmax.f32 %v330, 0.0
    %v389 = vmax.f32 %v335, 0.0
    %v390 = vmax.f32 %v338, 0.0
    %v391 = vmax.f32 %v343, 0.0
    %v392 = vmax.f32 %v346, 0.0
    %v393 = vmax.f32 %v351, 0.0
    %v394 = vmax.f32 %v354, 0.0
    %v395 = vmax.f32 %v359, 0.0
    %v396 = vmax.f32 %v362, 0.0
    %v397 = vpack.c.bf16 %v366, %v365
    %v398 = vpack.c.bf16 %v368, %v367
    %v399 = vpack.c.bf16 %v370, %v369
    %v400 = vpack.c.bf16 %v372, %v371
    %v401 = vpack.c.bf16 %v374, %v373
    %v402 = vpack.c.bf16 %v376, %v375
    %v403 = vpack.c.bf16 %v378, %v377
    %v404 = vpack.c.bf16 %v380, %v379
    %v405 = vpack.c.bf16 %v382, %v381
    %v406 = vpack.c.bf16 %v384, %v383
    %v407 = vpack.c.bf16 %v386, %v385
    %v408 = vpack.c.bf16 %v388, %v387
    %v409 = vpack.c.bf16 %v390, %v389
    %v410 = vpack.c.bf16 %v392, %v391
    %v411 = vpack.c.bf16 %v394, %v393
    %v412 = vpack.c.bf16 %v396, %v395
    %v413 = vld [vmem:[%s3] sm:$0xf]
    %v414 = vld [vmem:[%s3 + $0x4] sm:$0xf]
    %v415 = vld [vmem:[%s3 + $0x8] sm:$0xf]
    %v416 = vld [vmem:[%s3 + $0xc] sm:$0xf]
    %v417 = vld [vmem:[%s3 + $0x10] sm:$0xf]
    %v418 = vld [vmem:[%s3 + $0x14] sm:$0xf]
    %v419 = vld [vmem:[%s3 + $0x18] sm:$0xf]
    %v420 = vld [vmem:[%s3 + $0x1c] sm:$0xf]
    %v421 = vld [vmem:[%s3 + $0x20] sm:$0xf]
    %v422 = vld [vmem:[%s3 + $0x24] sm:$0xf]
    %v423 = vld [vmem:[%s3 + $0x28] sm:$0xf]
    %v424 = vld [vmem:[%s3 + $0x2c] sm:$0xf]
    %v425 = vld [vmem:[%s3 + $0x30] sm:$0xf]
    %v426 = vld [vmem:[%s3 + $0x34] sm:$0xf]
    %v427 = vld [vmem:[%s3 + $0x38] sm:$0xf]
    %v428 = vld [vmem:[%s3 + $0x3c] sm:$0xf]
    %v429 = vld [vmem:[%s4] sm:$0x1]
    %v431 = vlaneseq
    %v432 = vshrl.u32 %v431, 7
    %v433 = vsub.s32 0, %v432
    %v434 = vrot.slane %v429, %v433
    %v452 = vunpack.c.l.b16 %v413
    %v453 = vunpack.c.l.b16 %v414
    %v454 = vunpack.c.l.b16 %v415
    %v455 = vunpack.c.l.b16 %v416
    %v456 = vunpack.c.l.b16 %v417
    %v457 = vunpack.c.l.b16 %v418
    %v458 = vunpack.c.l.b16 %v419
    %v459 = vunpack.c.l.b16 %v420
    %v460 = vunpack.c.l.b16 %v421
    %v461 = vunpack.c.l.b16 %v422
    %v462 = vunpack.c.l.b16 %v423
    %v463 = vunpack.c.l.b16 %v424
    %v464 = vunpack.c.l.b16 %v425
    %v465 = vunpack.c.l.b16 %v426
    %v466 = vunpack.c.l.b16 %v427
    %v467 = vunpack.c.l.b16 %v428
    %v468 = vpack.c.b16 %v453, %v452
    %v469 = vpack.c.b16 %v455, %v454
    %v470 = vpack.c.b16 %v457, %v456
    %v471 = vpack.c.b16 %v459, %v458
    %v472 = vpack.c.b16 %v461, %v460
    %v473 = vpack.c.b16 %v463, %v462
    %v474 = vpack.c.b16 %v465, %v464
    %v475 = vpack.c.b16 %v467, %v466
    %484 = vmatprep.subr.bf16.mxu0 0
    %485 = vmatpush1.bf16.msra.mxu0 %v468
    %486 = vmatprep.subr.bf16.mxu0 0
    %487 = vmatpush1.bf16.msra.mxu0 %v469
    %488 = vmatprep.subr.bf16.mxu0 0
    %489 = vmatpush1.bf16.msra.mxu0 %v470
    %490 = vmatprep.subr.bf16.mxu0 0
    %491 = vmatpush1.bf16.msra.mxu0 %v471
    %492 = vmatprep.subr.bf16.mxu0 0
    %493 = vmatpush1.bf16.msra.mxu0 %v472
    %494 = vmatprep.subr.bf16.mxu0 0
    %495 = vmatpush1.bf16.msra.mxu0 %v473
    %496 = vmatprep.subr.bf16.mxu0 0
    %497 = vmatpush1.bf16.msra.mxu0 %v474
    %498 = vmatprep.subr.bf16.mxu0 0
    %499 = vmatpush1.bf16.msra.mxu0 %v475
    %500 = vmatprep.subr.bf16.mxu0 0
    %501 = vmatpush1.bf16.msra.mxu0 0
    %502 = vmatprep.subr.bf16.mxu0 0
    %503 = vmatpush1.bf16.msra.mxu0 0
    %504 = vmatprep.subr.bf16.mxu0 0
    %505 = vmatpush1.bf16.msra.mxu0 0
    %506 = vmatprep.subr.bf16.mxu0 0
    %507 = vmatpush1.bf16.msra.mxu0 0
    %508 = vmatprep.subr.bf16.mxu0 0
    %509 = vmatpush1.bf16.msra.mxu0 0
    %510 = vmatprep.subr.bf16.mxu0 0
    %511 = vmatpush1.bf16.msra.mxu0 0
    %512 = vmatprep.subr.bf16.mxu0 0
    %513 = vmatpush1.bf16.msra.mxu0 0
    %514 = vmatprep.subr.bf16.mxu0 0
    %515 = vmatpush1.bf16.msra.mxu0 0
    %516 = vmatprep.mubr.bf16.mxu0 0
    %517 = vmatmul.mubr.bf16.gmra.mrb[0].mxu0 %v397
    %v518 = vpop.f32.mrb[0].mxu0
    %v519 = vadd.f32 %v434, %v518
    %v520 = vpop.f32.mrb[0].mxu0
    %v521 = vpop.f32.mrb[0].mxu0
    %v522 = vadd.f32 %v434, %v521
    %v523 = vpop.f32.mrb[0].mxu0
    %524 = vmatprep.mubr.bf16.mxu0 0
    %525 = vmatmul.mubr.bf16.gmra.mrb[0].mxu0 %v398
    %v526 = vpop.f32.mrb[0].mxu0
    %v527 = vadd.f32 %v434, %v526
    %v528 = vpop.f32.mrb[0].mxu0
    %v529 = vpop.f32.mrb[0].mxu0
    %v530 = vadd.f32 %v434, %v529
    %v531 = vpop.f32.mrb[0].mxu0
    %532 = vmatprep.mubr.bf16.mxu0 0
    %533 = vmatmul.mubr.bf16.gmra.mrb[0].mxu0 %v399
    %v534 = vpop.f32.mrb[0].mxu0
    %v535 = vadd.f32 %v434, %v534
    %v536 = vpop.f32.mrb[0].mxu0
    %v537 = vpop.f32.mrb[0].mxu0
    %v538 = vadd.f32 %v434, %v537
    %v539 = vpop.f32.mrb[0].mxu0
    %540 = vmatprep.mubr.bf16.mxu0 0
    %541 = vmatmul.mubr.bf16.gmra.mrb[0].mxu0 %v400
    %v542 = vpop.f32.mrb[0].mxu0
    %v543 = vadd.f32 %v434, %v542
    %v544 = vpop.f32.mrb[0].mxu0
    %v545 = vpop.f32.mrb[0].mxu0
    %v546 = vadd.f32 %v434, %v545
    %v547 = vpop.f32.mrb[0].mxu0
    %548 = vmatprep.mubr.bf16.mxu0 0
    %549 = vmatmul.mubr.bf16.gmra.mrb[0].mxu0 %v401
    %v550 = vpop.f32.mrb[0].mxu0
    %v551 = vadd.f32 %v434, %v550
    %v552 = vpop.f32.mrb[0].mxu0
    %v553 = vpop.f32.mrb[0].mxu0
    %v554 = vadd.f32 %v434, %v553
    %v555 = vpop.f32.mrb[0].mxu0
    %556 = vmatprep.mubr.bf16.mxu0 0
    %557 = vmatmul.mubr.bf16.gmra.mrb[0].mxu0 %v402
    %v558 = vpop.f32.mrb[0].mxu0
    %v559 = vadd.f32 %v434, %v558
    %v560 = vpop.f32.mrb[0].mxu0
    %v561 = vpop.f32.mrb[0].mxu0
    %v562 = vadd.f32 %v434, %v561
    %v563 = vpop.f32.mrb[0].mxu0
    %564 = vmatprep.mubr.bf16.mxu0 0
    %565 = vmatmul.mubr.bf16.gmra.mrb[0].mxu0 %v403
    %v566 = vpop.f32.mrb[0].mxu0
    %v567 = vadd.f32 %v434, %v566
    %v568 = vpop.f32.mrb[0].mxu0
    %v569 = vpop.f32.mrb[0].mxu0
    %v570 = vadd.f32 %v434, %v569
    %v571 = vpop.f32.mrb[0].mxu0
    %572 = vmatprep.mubr.bf16.mxu0 0
    %573 = vmatmul.mubr.bf16.gmra.mrb[0].mxu0 %v404
    %v574 = vpop.f32.mrb[0].mxu0
    %v575 = vadd.f32 %v434, %v574
    %v576 = vpop.f32.mrb[0].mxu0
    %v577 = vpop.f32.mrb[0].mxu0
    %v578 = vadd.f32 %v434, %v577
    %v579 = vpop.f32.mrb[0].mxu0
    %580 = vmatprep.mubr.bf16.mxu0 0
    %581 = vmatmul.mubr.bf16.gmra.mrb[0].mxu0 %v405
    %v582 = vpop.f32.mrb[0].mxu0
    %v583 = vadd.f32 %v434, %v582
    %v584 = vpop.f32.mrb[0].mxu0
    %v585 = vpop.f32.mrb[0].mxu0
    %v586 = vadd.f32 %v434, %v585
    %v587 = vpop.f32.mrb[0].mxu0
    %588 = vmatprep.mubr.bf16.mxu0 0
    %589 = vmatmul.mubr.bf16.gmra.mrb[0].mxu0 %v406
    %v590 = vpop.f32.mrb[0].mxu0
    %v591 = vadd.f32 %v434, %v590
    %v592 = vpop.f32.mrb[0].mxu0
    %v593 = vpop.f32.mrb[0].mxu0
    %v594 = vadd.f32 %v434, %v593
    %v595 = vpop.f32.mrb[0].mxu0
    %596 = vmatprep.mubr.bf16.mxu0 0
    %597 = vmatmul.mubr.bf16.gmra.mrb[0].mxu0 %v407
    %v598 = vpop.f32.mrb[0].mxu0
    %v599 = vadd.f32 %v434, %v598
    %v600 = vpop.f32.mrb[0].mxu0
    %v601 = vpop.f32.mrb[0].mxu0
    %v602 = vadd.f32 %v434, %v601
    %v603 = vpop.f32.mrb[0].mxu0
    %604 = vmatprep.mubr.bf16.mxu0 0
    %605 = vmatmul.mubr.bf16.gmra.mrb[0].mxu0 %v408
    %v606 = vpop.f32.mrb[0].mxu0
    %v607 = vadd.f32 %v434, %v606
    %v608 = vpop.f32.mrb[0].mxu0
    %v609 = vpop.f32.mrb[0].mxu0
    %v610 = vadd.f32 %v434, %v609
    %v611 = vpop.f32.mrb[0].mxu0
    %612 = vmatprep.mubr.bf16.mxu0 0
    %613 = vmatmul.mubr.bf16.gmra.mrb[0].mxu0 %v409
    %v614 = vpop.f32.mrb[0].mxu0
    %v615 = vadd.f32 %v434, %v614
    %v616 = vpop.f32.mrb[0].mxu0
    %v617 = vpop.f32.mrb[0].mxu0
    %v618 = vadd.f32 %v434, %v617
    %v619 = vpop.f32.mrb[0].mxu0
    %620 = vmatprep.mubr.bf16.mxu0 0
    %621 = vmatmul.mubr.bf16.gmra.mrb[0].mxu0 %v410
    %v622 = vpop.f32.mrb[0].mxu0
    %v623 = vadd.f32 %v434, %v622
    %v624 = vpop.f32.mrb[0].mxu0
    %v625 = vpop.f32.mrb[0].mxu0
    %v626 = vadd.f32 %v434, %v625
    %v627 = vpop.f32.mrb[0].mxu0
    %628 = vmatprep.mubr.bf16.mxu0 0
    %629 = vmatmul.mubr.bf16.gmra.mrb[0].mxu0 %v411
    %v630 = vpop.f32.mrb[0].mxu0
    %v631 = vadd.f32 %v434, %v630
    %v632 = vpop.f32.mrb[0].mxu0
    %v633 = vpop.f32.mrb[0].mxu0
    %v634 = vadd.f32 %v434, %v633
    %v635 = vpop.f32.mrb[0].mxu0
    %636 = vmatprep.mubr.bf16.mxu0 0
    %637 = vmatmul.mubr.bf16.gmra.mrb[0].mxu0 %v412
    %v638 = vpop.f32.mrb[0].mxu0
    %v639 = vadd.f32 %v434, %v638
    %v640 = vpop.f32.mrb[0].mxu0
    %v641 = vpop.f32.mrb[0].mxu0
    %v642 = vadd.f32 %v434, %v641
    %v643 = vpop.f32.mrb[0].mxu0
    %644 = vdwg.mxu0
    %v645 = vmax.f32 %v519, 0.0
    %v646 = vmax.f32 %v522, 0.0
    %v647 = vmax.f32 %v527, 0.0
    %v648 = vmax.f32 %v530, 0.0
    %v649 = vmax.f32 %v535, 0.0
    %v650 = vmax.f32 %v538, 0.0
    %v651 = vmax.f32 %v543, 0.0
    %v652 = vmax.f32 %v546, 0.0
    %v653 = vmax.f32 %v551, 0.0
    %v654 = vmax.f32 %v554, 0.0
    %v655 = vmax.f32 %v559, 0.0
    %v656 = vmax.f32 %v562, 0.0
    %v657 = vmax.f32 %v567, 0.0
    %v658 = vmax.f32 %v570, 0.0
    %v659 = vmax.f32 %v575, 0.0
    %v660 = vmax.f32 %v578, 0.0
    %v661 = vmax.f32 %v583, 0.0
    %v662 = vmax.f32 %v586, 0.0
    %v663 = vmax.f32 %v591, 0.0
    %v664 = vmax.f32 %v594, 0.0
    %v665 = vmax.f32 %v599, 0.0
    %v666 = vmax.f32 %v602, 0.0
    %v667 = vmax.f32 %v607, 0.0
    %v668 = vmax.f32 %v610, 0.0
    %v669 = vmax.f32 %v615, 0.0
    %v670 = vmax.f32 %v618, 0.0
    %v671 = vmax.f32 %v623, 0.0
    %v672 = vmax.f32 %v626, 0.0
    %v673 = vmax.f32 %v631, 0.0
    %v674 = vmax.f32 %v634, 0.0
    %v675 = vmax.f32 %v639, 0.0
    %v676 = vmax.f32 %v642, 0.0
    %v677 = vpack.c.bf16 %v646, %v645
    %v678 = vpack.c.bf16 %v648, %v647
    %v679 = vpack.c.bf16 %v650, %v649
    %v680 = vpack.c.bf16 %v652, %v651
    %v681 = vpack.c.bf16 %v654, %v653
    %v682 = vpack.c.bf16 %v656, %v655
    %v683 = vpack.c.bf16 %v658, %v657
    %v684 = vpack.c.bf16 %v660, %v659
    %v685 = vpack.c.bf16 %v662, %v661
    %v686 = vpack.c.bf16 %v664, %v663
    %v687 = vpack.c.bf16 %v666, %v665
    %v688 = vpack.c.bf16 %v668, %v667
    %v689 = vpack.c.bf16 %v670, %v669
    %v690 = vpack.c.bf16 %v672, %v671
    %v691 = vpack.c.bf16 %v674, %v673
    %v692 = vpack.c.bf16 %v676, %v675
    %v693 = vld [vmem:[%s5] sm:$0xf]
    %v694 = vld [vmem:[%s5 + $0x4] sm:$0xf]
    %v695 = vld [vmem:[%s5 + $0x8] sm:$0xf]
    %v696 = vld [vmem:[%s5 + $0xc] sm:$0xf]
    %v697 = vld [vmem:[%s5 + $0x10] sm:$0xf]
    %v698 = vld [vmem:[%s5 + $0x14] sm:$0xf]
    %v699 = vld [vmem:[%s5 + $0x18] sm:$0xf]
    %v700 = vld [vmem:[%s5 + $0x1c] sm:$0xf]
    %v701 = vld [vmem:[%s5 + $0x20] sm:$0xf]
    %v702 = vld [vmem:[%s5 + $0x24] sm:$0xf]
    %v703 = vld [vmem:[%s5 + $0x28] sm:$0xf]
    %v704 = vld [vmem:[%s5 + $0x2c] sm:$0xf]
    %v705 = vld [vmem:[%s5 + $0x30] sm:$0xf]
    %v706 = vld [vmem:[%s5 + $0x34] sm:$0xf]
    %v707 = vld [vmem:[%s5 + $0x38] sm:$0xf]
    %v708 = vld [vmem:[%s5 + $0x3c] sm:$0xf]
    %v709 = vld [vmem:[%s6] sm:$0x1]
    %v711 = vlaneseq
    %v712 = vshrl.u32 %v711, 7
    %v713 = vsub.s32 0, %v712
    %v714 = vrot.slane %v709, %v713
    %v732 = vunpack.c.l.b16 %v693
    %v733 = vunpack.c.l.b16 %v694
    %v734 = vunpack.c.l.b16 %v695
    %v735 = vunpack.c.l.b16 %v696
    %v736 = vunpack.c.l.b16 %v697
    %v737 = vunpack.c.l.b16 %v698
    %v738 = vunpack.c.l.b16 %v699
    %v739 = vunpack.c.l.b16 %v700
    %v740 = vunpack.c.l.b16 %v701
    %v741 = vunpack.c.l.b16 %v702
    %v742 = vunpack.c.l.b16 %v703
    %v743 = vunpack.c.l.b16 %v704
    %v744 = vunpack.c.l.b16 %v705
    %v745 = vunpack.c.l.b16 %v706
    %v746 = vunpack.c.l.b16 %v707
    %v747 = vunpack.c.l.b16 %v708
    %v748 = vpack.c.b16 %v733, %v732
    %v749 = vpack.c.b16 %v735, %v734
    %v750 = vpack.c.b16 %v737, %v736
    %v751 = vpack.c.b16 %v739, %v738
    %v752 = vpack.c.b16 %v741, %v740
    %v753 = vpack.c.b16 %v743, %v742
    %v754 = vpack.c.b16 %v745, %v744
    %v755 = vpack.c.b16 %v747, %v746
    %764 = vmatprep.subr.bf16.mxu0 0
    %765 = vmatpush1.bf16.msra.mxu0 %v748
    %766 = vmatprep.subr.bf16.mxu0 0
    %767 = vmatpush1.bf16.msra.mxu0 %v749
    %768 = vmatprep.subr.bf16.mxu0 0
    %769 = vmatpush1.bf16.msra.mxu0 %v750
    %770 = vmatprep.subr.bf16.mxu0 0
    %771 = vmatpush1.bf16.msra.mxu0 %v751
    %772 = vmatprep.subr.bf16.mxu0 0
    %773 = vmatpush1.bf16.msra.mxu0 %v752
    %774 = vmatprep.subr.bf16.mxu0 0
    %775 = vmatpush1.bf16.msra.mxu0 %v753
    %776 = vmatprep.subr.bf16.mxu0 0
    %777 = vmatpush1.bf16.msra.mxu0 %v754
    %778 = vmatprep.subr.bf16.mxu0 0
    %779 = vmatpush1.bf16.msra.mxu0 %v755
    %780 = vmatprep.subr.bf16.mxu0 0
    %781 = vmatpush1.bf16.msra.mxu0 0
    %782 = vmatprep.subr.bf16.mxu0 0
    %783 = vmatpush1.bf16.msra.mxu0 0
    %784 = vmatprep.subr.bf16.mxu0 0
    %785 = vmatpush1.bf16.msra.mxu0 0
    %786 = vmatprep.subr.bf16.mxu0 0
    %787 = vmatpush1.bf16.msra.mxu0 0
    %788 = vmatprep.subr.bf16.mxu0 0
    %789 = vmatpush1.bf16.msra.mxu0 0
    %790 = vmatprep.subr.bf16.mxu0 0
    %791 = vmatpush1.bf16.msra.mxu0 0
    %792 = vmatprep.subr.bf16.mxu0 0
    %793 = vmatpush1.bf16.msra.mxu0 0
    %794 = vmatprep.subr.bf16.mxu0 0
    %795 = vmatpush1.bf16.msra.mxu0 0
    %796 = vmatprep.mubr.bf16.mxu0 0
    %797 = vmatmul.mubr.bf16.gmra.mrb[0].mxu0 %v677
    %v798 = vpop.f32.mrb[0].mxu0
    %v799 = vadd.f32 %v714, %v798
    %v800 = vpop.f32.mrb[0].mxu0
    %v801 = vpop.f32.mrb[0].mxu0
    %v802 = vadd.f32 %v714, %v801
    %v803 = vpop.f32.mrb[0].mxu0
    %804 = vmatprep.mubr.bf16.mxu0 0
    %805 = vmatmul.mubr.bf16.gmra.mrb[0].mxu0 %v678
    %v806 = vpop.f32.mrb[0].mxu0
    %v807 = vadd.f32 %v714, %v806
    %v808 = vpop.f32.mrb[0].mxu0
    %v809 = vpop.f32.mrb[0].mxu0
    %v810 = vadd.f32 %v714, %v809
    %v811 = vpop.f32.mrb[0].mxu0
    %812 = vmatprep.mubr.bf16.mxu0 0
    %813 = vmatmul.mubr.bf16.gmra.mrb[0].mxu0 %v679
    %v814 = vpop.f32.mrb[0].mxu0
    %v815 = vadd.f32 %v714, %v814
    %v816 = vpop.f32.mrb[0].mxu0
    %v817 = vpop.f32.mrb[0].mxu0
    %v818 = vadd.f32 %v714, %v817
    %v819 = vpop.f32.mrb[0].mxu0
    %820 = vmatprep.mubr.bf16.mxu0 0
    %821 = vmatmul.mubr.bf16.gmra.mrb[0].mxu0 %v680
    %v822 = vpop.f32.mrb[0].mxu0
    %v823 = vadd.f32 %v714, %v822
    %v824 = vpop.f32.mrb[0].mxu0
    %v825 = vpop.f32.mrb[0].mxu0
    %v826 = vadd.f32 %v714, %v825
    %v827 = vpop.f32.mrb[0].mxu0
    %828 = vmatprep.mubr.bf16.mxu0 0
    %829 = vmatmul.mubr.bf16.gmra.mrb[0].mxu0 %v681
    %v830 = vpop.f32.mrb[0].mxu0
    %v831 = vadd.f32 %v714, %v830
    %v832 = vpop.f32.mrb[0].mxu0
    %v833 = vpop.f32.mrb[0].mxu0
    %v834 = vadd.f32 %v714, %v833
    %v835 = vpop.f32.mrb[0].mxu0
    %836 = vmatprep.mubr.bf16.mxu0 0
    %837 = vmatmul.mubr.bf16.gmra.mrb[0].mxu0 %v682
    %v838 = vpop.f32.mrb[0].mxu0
    %v839 = vadd.f32 %v714, %v838
    %v840 = vpop.f32.mrb[0].mxu0
    %v841 = vpop.f32.mrb[0].mxu0
    %v842 = vadd.f32 %v714, %v841
    %v843 = vpop.f32.mrb[0].mxu0
    %844 = vmatprep.mubr.bf16.mxu0 0
    %845 = vmatmul.mubr.bf16.gmra.mrb[0].mxu0 %v683
    %v846 = vpop.f32.mrb[0].mxu0
    %v847 = vadd.f32 %v714, %v846
    %v848 = vpop.f32.mrb[0].mxu0
    %v849 = vpop.f32.mrb[0].mxu0
    %v850 = vadd.f32 %v714, %v849
    %v851 = vpop.f32.mrb[0].mxu0
    %852 = vmatprep.mubr.bf16.mxu0 0
    %853 = vmatmul.mubr.bf16.gmra.mrb[0].mxu0 %v684
    %v854 = vpop.f32.mrb[0].mxu0
    %v855 = vadd.f32 %v714, %v854
    %v856 = vpop.f32.mrb[0].mxu0
    %v857 = vpop.f32.mrb[0].mxu0
    %v858 = vadd.f32 %v714, %v857
    %v859 = vpop.f32.mrb[0].mxu0
    %860 = vmatprep.mubr.bf16.mxu0 0
    %861 = vmatmul.mubr.bf16.gmra.mrb[0].mxu0 %v685
    %v862 = vpop.f32.mrb[0].mxu0
    %v863 = vadd.f32 %v714, %v862
    %v864 = vpop.f32.mrb[0].mxu0
    %v865 = vpop.f32.mrb[0].mxu0
    %v866 = vadd.f32 %v714, %v865
    %v867 = vpop.f32.mrb[0].mxu0
    %868 = vmatprep.mubr.bf16.mxu0 0
    %869 = vmatmul.mubr.bf16.gmra.mrb[0].mxu0 %v686
    %v870 = vpop.f32.mrb[0].mxu0
    %v871 = vadd.f32 %v714, %v870
    %v872 = vpop.f32.mrb[0].mxu0
    %v873 = vpop.f32.mrb[0].mxu0
    %v874 = vadd.f32 %v714, %v873
    %v875 = vpop.f32.mrb[0].mxu0
    %876 = vmatprep.mubr.bf16.mxu0 0
    %877 = vmatmul.mubr.bf16.gmra.mrb[0].mxu0 %v687
    %v878 = vpop.f32.mrb[0].mxu0
    %v879 = vadd.f32 %v714, %v878
    %v880 = vpop.f32.mrb[0].mxu0
    %v881 = vpop.f32.mrb[0].mxu0
    %v882 = vadd.f32 %v714, %v881
    %v883 = vpop.f32.mrb[0].mxu0
    %884 = vmatprep.mubr.bf16.mxu0 0
    %885 = vmatmul.mubr.bf16.gmra.mrb[0].mxu0 %v688
    %v886 = vpop.f32.mrb[0].mxu0
    %v887 = vadd.f32 %v714, %v886
    %v888 = vpop.f32.mrb[0].mxu0
    %v889 = vpop.f32.mrb[0].mxu0
    %v890 = vadd.f32 %v714, %v889
    %v891 = vpop.f32.mrb[0].mxu0
    %892 = vmatprep.mubr.bf16.mxu0 0
    %893 = vmatmul.mubr.bf16.gmra.mrb[0].mxu0 %v689
    %v894 = vpop.f32.mrb[0].mxu0
    %v895 = vadd.f32 %v714, %v894
    %v896 = vpop.f32.mrb[0].mxu0
    %v897 = vpop.f32.mrb[0].mxu0
    %v898 = vadd.f32 %v714, %v897
    %v899 = vpop.f32.mrb[0].mxu0
    %900 = vmatprep.mubr.bf16.mxu0 0
    %901 = vmatmul.mubr.bf16.gmra.mrb[0].mxu0 %v690
    %v902 = vpop.f32.mrb[0].mxu0
    %v903 = vadd.f32 %v714, %v902
    %v904 = vpop.f32.mrb[0].mxu0
    %v905 = vpop.f32.mrb[0].mxu0
    %v906 = vadd.f32 %v714, %v905
    %v907 = vpop.f32.mrb[0].mxu0
    %908 = vmatprep.mubr.bf16.mxu0 0
    %909 = vmatmul.mubr.bf16.gmra.mrb[0].mxu0 %v691
    %v910 = vpop.f32.mrb[0].mxu0
    %v911 = vadd.f32 %v714, %v910
    %v912 = vpop.f32.mrb[0].mxu0
    %v913 = vpop.f32.mrb[0].mxu0
    %v914 = vadd.f32 %v714, %v913
    %v915 = vpop.f32.mrb[0].mxu0
    %916 = vmatprep.mubr.bf16.mxu0 0
    %917 = vmatmul.mubr.bf16.gmra.mrb[0].mxu0 %v692
    %v918 = vpop.f32.mrb[0].mxu0
    %v919 = vadd.f32 %v714, %v918
    %v920 = vpop.f32.mrb[0].mxu0
    %v921 = vpop.f32.mrb[0].mxu0
    %v922 = vadd.f32 %v714, %v921
    %v923 = vpop.f32.mrb[0].mxu0
    %924 = vdwg.mxu0
    %v925 = vpack.c.bf16 %v802, %v799
    %v926 = vpack.c.bf16 %v810, %v807
    %v927 = vpack.c.bf16 %v818, %v815
    %v928 = vpack.c.bf16 %v826, %v823
    %v929 = vpack.c.bf16 %v834, %v831
    %v930 = vpack.c.bf16 %v842, %v839
    %v931 = vpack.c.bf16 %v850, %v847
    %v932 = vpack.c.bf16 %v858, %v855
    %v933 = vpack.c.bf16 %v866, %v863
    %v934 = vpack.c.bf16 %v874, %v871
    %v935 = vpack.c.bf16 %v882, %v879
    %v936 = vpack.c.bf16 %v890, %v887
    %v937 = vpack.c.bf16 %v898, %v895
    %v938 = vpack.c.bf16 %v906, %v903
    %v939 = vpack.c.bf16 %v914, %v911
    %v940 = vpack.c.bf16 %v922, %v919
    %v957 = vunpack.c.l.b16 %v925
    %v958 = vunpack.c.h.b16 %v925
    %v959 = vunpack.c.l.b16 %v926
    %v960 = vunpack.c.h.b16 %v926
    %v961 = vunpack.c.l.b16 %v927
    %v962 = vunpack.c.h.b16 %v927
    %v963 = vunpack.c.l.b16 %v928
    %v964 = vunpack.c.h.b16 %v928
    %v965 = vunpack.c.l.b16 %v929
    %v966 = vunpack.c.h.b16 %v929
    %v967 = vunpack.c.l.b16 %v930
    %v968 = vunpack.c.h.b16 %v930
    %v969 = vunpack.c.l.b16 %v931
    %v970 = vunpack.c.h.b16 %v931
    %v971 = vunpack.c.l.b16 %v932
    %v972 = vunpack.c.h.b16 %v932
    %v973 = vunpack.c.l.b16 %v933
    %v974 = vunpack.c.h.b16 %v933
    %v975 = vunpack.c.l.b16 %v934
    %v976 = vunpack.c.h.b16 %v934
    %v977 = vunpack.c.l.b16 %v935
    %v978 = vunpack.c.h.b16 %v935
    %v979 = vunpack.c.l.b16 %v936
    %v980 = vunpack.c.h.b16 %v936
    %v981 = vunpack.c.l.b16 %v937
    %v982 = vunpack.c.h.b16 %v937
    %v983 = vunpack.c.l.b16 %v938
    %v984 = vunpack.c.h.b16 %v938
    %v985 = vunpack.c.l.b16 %v939
    %v986 = vunpack.c.h.b16 %v939
    %v987 = vunpack.c.l.b16 %v940
    %v988 = vunpack.c.h.b16 %v940
    %v989 = vpack.c.b16 %v957, %v957
    %v990 = vpack.c.b16 %v958, %v958
    %v991 = vpack.c.b16 %v959, %v959
    %v992 = vpack.c.b16 %v960, %v960
    %v993 = vpack.c.b16 %v961, %v961
    %v994 = vpack.c.b16 %v962, %v962
    %v995 = vpack.c.b16 %v963, %v963
    %v996 = vpack.c.b16 %v964, %v964
    %v997 = vpack.c.b16 %v965, %v965
    %v998 = vpack.c.b16 %v966, %v966
    %v999 = vpack.c.b16 %v967, %v967
    %v1000 = vpack.c.b16 %v968, %v968
    %v1001 = vpack.c.b16 %v969, %v969
    %v1002 = vpack.c.b16 %v970, %v970
    %v1003 = vpack.c.b16 %v971, %v971
    %v1004 = vpack.c.b16 %v972, %v972
    %v1005 = vpack.c.b16 %v973, %v973
    %v1006 = vpack.c.b16 %v974, %v974
    %v1007 = vpack.c.b16 %v975, %v975
    %v1008 = vpack.c.b16 %v976, %v976
    %v1009 = vpack.c.b16 %v977, %v977
    %v1010 = vpack.c.b16 %v978, %v978
    %v1011 = vpack.c.b16 %v979, %v979
    %v1012 = vpack.c.b16 %v980, %v980
    %v1013 = vpack.c.b16 %v981, %v981
    %v1014 = vpack.c.b16 %v982, %v982
    %v1015 = vpack.c.b16 %v983, %v983
    %v1016 = vpack.c.b16 %v984, %v984
    %v1017 = vpack.c.b16 %v985, %v985
    %v1018 = vpack.c.b16 %v986, %v986
    %v1019 = vpack.c.b16 %v987, %v987
    %v1020 = vpack.c.b16 %v988, %v988
    %1053 = vst [vmem:[#allocation2] sm:$0xf] %v989
    %1054 = vst [vmem:[#allocation2 + $0x4] sm:$0xf] %v990
    %1055 = vst [vmem:[#allocation2 + $0x8] sm:$0xf] %v991
    %1056 = vst [vmem:[#allocation2 + $0xc] sm:$0xf] %v992
    %1057 = vst [vmem:[#allocation2 + $0x10] sm:$0xf] %v993
    %1058 = vst [vmem:[#allocation2 + $0x14] sm:$0xf] %v994
    %1059 = vst [vmem:[#allocation2 + $0x18] sm:$0xf] %v995
    %1060 = vst [vmem:[#allocation2 + $0x1c] sm:$0xf] %v996
    %1061 = vst [vmem:[#allocation2 + $0x20] sm:$0xf] %v997
    %1062 = vst [vmem:[#allocation2 + $0x24] sm:$0xf] %v998
    %1063 = vst [vmem:[#allocation2 + $0x28] sm:$0xf] %v999
    %1064 = vst [vmem:[#allocation2 + $0x2c] sm:$0xf] %v1000
    %1065 = vst [vmem:[#allocation2 + $0x30] sm:$0xf] %v1001
    %1066 = vst [vmem:[#allocation2 + $0x34] sm:$0xf] %v1002
    %1067 = vst [vmem:[#allocation2 + $0x38] sm:$0xf] %v1003
    %1068 = vst [vmem:[#allocation2 + $0x3c] sm:$0xf] %v1004
    %1069 = vst [vmem:[#allocation2 + $0x40] sm:$0xf] %v1005
    %1070 = vst [vmem:[#allocation2 + $0x44] sm:$0xf] %v1006
    %1071 = vst [vmem:[#allocation2 + $0x48] sm:$0xf] %v1007
    %1072 = vst [vmem:[#allocation2 + $0x4c] sm:$0xf] %v1008
    %1073 = vst [vmem:[#allocation2 + $0x50] sm:$0xf] %v1009
    %1074 = vst [vmem:[#allocation2 + $0x54] sm:$0xf] %v1010
    %1075 = vst [vmem:[#allocation2 + $0x58] sm:$0xf] %v1011
    %1076 = vst [vmem:[#allocation2 + $0x5c] sm:$0xf] %v1012
    %1077 = vst [vmem:[#allocation2 + $0x60] sm:$0xf] %v1013
    %1078 = vst [vmem:[#allocation2 + $0x64] sm:$0xf] %v1014
    %1079 = vst [vmem:[#allocation2 + $0x68] sm:$0xf] %v1015
    %1080 = vst [vmem:[#allocation2 + $0x6c] sm:$0xf] %v1016
    %1081 = vst [vmem:[#allocation2 + $0x70] sm:$0xf] %v1017
    %1082 = vst [vmem:[#allocation2 + $0x74] sm:$0xf] %v1018
    %1083 = vst [vmem:[#allocation2 + $0x78] sm:$0xf] %v1019
    %1084 = vst [vmem:[#allocation2 + $0x7c] sm:$0xf] %v1020
    // Predicated region
    $region30: #{tpu_custom_call.1} parent=1 // pred_check
      _
    $region31: #{tpu_custom_call.1} parent=1 // pred_check_branch
      %1086 = sbr.rel (0) target = $region33
    $region32: #{tpu_custom_call.1} parent=1 // pred_region
      %s1088 = ssub.s32 2048, 2048
      %1089 = vsyncadd [#allocation3], %s1088
      %s1090 = sshll.u32 [#allocation2], 4
      %s1091 = int_to_ptr.vmem [resolvable:$true] %s1090
      %1096 = dma.vmem_to_hbm [thread:$0]  %s1091, 2048, %s7, [#allocation3], 64, 64, 4
    $region33: #{tpu_custom_call.1} parent=1 // pred_fallthru
      _
    // Predicated region
    $region34: #{tpu_custom_call.1} parent=1 // pred_check
      _
    $region35: #{tpu_custom_call.1} parent=1 // pred_check_branch
      %1098 = sbr.rel (0) target = $region37
    $region36: #{tpu_custom_call.1} parent=1 // pred_region
      %1099 = dma.done [#allocation3], 2048
    $region37: #{tpu_custom_call.1} parent=1 // pred_fallthru
      _
    %1100 = vsyncpa [#allocation3], 1

</llo_original>
